<compile_context>
chip_gen: v7x
topology: tpu7x:2x2x1
jax: 0.10.0
libtpu: 0.0.40
codegen_flags: <defaults>
</compile_context>

<pallas_src>
import functools

import jax
import jax.numpy as jnp
from jax.experimental import pallas as pl
from jax.experimental.pallas import tpu as pltpu


def _round_up(n: int, m: int) -> int:
    return ((n + m - 1) // m) * m


def _cdiv(a: int, b: int) -> int:
    return -(-a // b)


def _corr2d_kernel(x_ref, w_ref, b_ref, o_ref, *, kh, kw):
    """One batch block of packed super-images.

    x_ref: (BB, H, PW)  f32 VMEM, PW a multiple of 128 lanes
    w_ref: (kh*kw,)     f32 SMEM (flattened taps)
    b_ref: (1,)         f32 SMEM
    o_ref: (BB, OH, PW) f32 VMEM, OH = H - kh + 1
    """
    bb, h, pw = x_ref.shape
    oh = o_ref.shape[1]
    bias = b_ref[0]          # read the SMEM scalar once, outside the loop

    @pl.loop(0, bb)
    def _(g):
        img = x_ref[g]                                   # (H, PW)
        # Pre-roll the whole tile once per column tap: kw-1 XLU rolls total
        # instead of kh*(kw-1).  Circular wraparound is safe because a valid
        # output column c (c <= W-kw) of a packed W-lane segment only reads
        # lanes c+j <= W-1 inside its own segment; wrapped lanes land only in
        # columns >= ow (or the zero lane padding), which the wrapper slices
        # away.  Keep this invariant if the packing/padding layout changes.
        shifted = [img] + [pltpu.roll(img, pw - j, axis=1)
                           for j in range(1, kw)]
        # Bias folded into the accumulator init (saves a final VALU pass).
        acc = jnp.full((oh, pw), bias, dtype=jnp.float32)
        for i in range(kh):
            for j in range(kw):
                acc = acc + shifted[j][i:i + oh, :] * w_ref[i * kw + j]
        o_ref[g] = acc


def conv2d_pallas(x, weight, bias):
    """Equivalent of Conv2D.forward: corr2d(x, weight) + bias.

    Accepts a single image (H, W) -- the module's forward signature -- or a
    batch (B, H, W); batching amortizes per-call overhead and feeds the grid.
    """
    squeeze = x.ndim == 2
    if squeeze:
        x = x[None]
    x = x.astype(jnp.float32)
    b, h, w = x.shape
    kh, kw = weight.shape
    if h < kh or w < kw:
        raise ValueError(f"input {(h, w)} smaller than kernel {(kh, kw)}")
    oh, ow = h - kh + 1, w - kw + 1

    # ---- packed geometry --------------------------------------------------
    lp = max(1, 128 // w)                 # images packed per lane row
    pw = _round_up(lp * w, 128)           # packed lane width (128-aligned)
    g = _cdiv(b, lp)                      # number of packed super-images

    # Batch block size: target ~512 output sublane rows per grid step, cap the
    # per-step block (in+out) at ~4 MiB so double-buffering fits comfortably
    # under the explicit 32 MiB scoped-VMEM limit on every generation, and
    # keep >= 2 grid steps when possible so v7x megacore gets both TCs busy.
    bb = max(1, _cdiv(512, oh))
    per_img_bytes = (h + oh) * pw * 4
    bb = min(bb, max(1, (4 * 1024 * 1024) // per_img_bytes))
    bb = min(bb, g)
    if g > 1:
        bb = min(bb, _cdiv(g, 2))
    n_steps = _cdiv(g, bb)
    g_pad = n_steps * bb
    b_pad = g_pad * lp

    # ---- pack: (B, H, W) -> (G_pad, H, PW) ---------------------------------
    if b_pad != b:
        x = jnp.concatenate(
            [x, jnp.zeros((b_pad - b, h, w), jnp.float32)], axis=0)
    if lp > 1:
        xp = (x.reshape(g_pad, lp, h, w)
               .transpose(0, 2, 1, 3)
               .reshape(g_pad, h, lp * w))
    else:
        xp = x
    if pw != lp * w:
        xp = jnp.pad(xp, ((0, 0), (0, 0), (0, pw - lp * w)))

    kernel = functools.partial(_corr2d_kernel, kh=kh, kw=kw)
    cost = pl.CostEstimate(
        flops=2 * b * oh * ow * kh * kw,
        transcendentals=0,
        bytes_accessed=4 * (b * h * w + b * oh * ow + kh * kw + 1),
    )
    out_p = pl.pallas_call(
        kernel,
        out_shape=jax.ShapeDtypeStruct((g_pad, oh, pw), jnp.float32),
        grid_spec=pltpu.PrefetchScalarGridSpec(
            num_scalar_prefetch=0,
            grid=(n_steps,),
            in_specs=[
                # One batch block of BB packed super-images per grid step.
                pl.BlockSpec((bb, h, pw), lambda s: (s, 0, 0)),
                pl.BlockSpec(memory_space=pltpu.MemorySpace.SMEM),
                pl.BlockSpec(memory_space=pltpu.MemorySpace.SMEM),
            ],
            out_specs=pl.BlockSpec((bb, oh, pw), lambda s: (s, 0, 0)),
        ),
        compiler_params=pltpu.CompilerParams(
            dimension_semantics=("parallel",),
            vmem_limit_bytes=32 * 1024 * 1024,
        ),
        cost_estimate=cost,
    )(xp, weight.astype(jnp.float32).reshape(-1), bias.astype(jnp.float32))

    # ---- unpack: (G_pad, OH, PW) -> (B, OH, OW) ----------------------------
    # TODO(synk): for very large outputs, fuse this unpack into the kernel
    # store (second grid axis over lane segments) to drop one HBM round trip.
    out = out_p[:, :, :lp * w]
    if lp > 1:
        out = (out.reshape(g_pad, oh, lp, w)
                  .transpose(0, 2, 1, 3)
                  .reshape(b_pad, oh, w))
    out = out[:b, :, :ow]
    return out[0] if squeeze else out


def corr2d_ref(x, k):
    """Pure-JAX reference mirroring the PyTorch corr2d loop semantics."""
    kh, kw = k.shape
    oh, ow = x.shape[0] - kh + 1, x.shape[1] - kw + 1
    out = jnp.zeros((oh, ow), dtype=jnp.float32)
    for i in range(kh):
        for j in range(kw):
            out = out + x[i:i + oh, j:j + ow] * k[i, j]
    return out


if __name__ == "__main__":
    key = jax.random.PRNGKey(0)
    k_x, k_w, k_x2 = jax.random.split(key, 3)

    # Small shapes consistent with the module: batch of 16x16 images, 3x3 kernel.
    B, H, W = 2, 16, 16
    KH, KW = 3, 3

    x = jax.random.normal(k_x, (B, H, W), dtype=jnp.float32)
    # Deterministic params matching __init__: weight ~ U[0,1), bias = zeros(1).
    weight = jax.random.uniform(k_w, (KH, KW), dtype=jnp.float32)
    bias = jnp.zeros((1,), dtype=jnp.float32)

    out = jax.block_until_ready(conv2d_pallas(x, weight, bias))
    assert out.shape == (B, H - KH + 1, W - KW + 1)
    ref = jnp.stack([corr2d_ref(x[i], weight) + bias[0] for i in range(B)])
    assert jnp.allclose(out, ref, atol=1e-5, rtol=1e-5)

    # Single 2D image path == the module's forward signature.
    out1 = jax.block_until_ready(conv2d_pallas(x[0], weight, bias))
    assert out1.shape == (H - KH + 1, W - KW + 1)
    assert jnp.allclose(out1, corr2d_ref(x[0], weight) + bias[0],
                        atol=1e-5, rtol=1e-5)

    # Awkward geometry: lane packing with lane padding, non-multiple-of-8 rows,
    # non-square kernel, non-zero bias and batch padding.
    B2, H2, W2, KH2, KW2 = 5, 12, 20, 2, 4
    x2 = jax.random.normal(k_x2, (B2, H2, W2), dtype=jnp.float32)
    w2 = jax.random.uniform(jax.random.PRNGKey(1), (KH2, KW2), dtype=jnp.float32)
    b2 = jnp.full((1,), 0.25, dtype=jnp.float32)
    out2 = jax.block_until_ready(conv2d_pallas(x2, w2, b2))
    ref2 = jnp.stack([corr2d_ref(x2[i], w2) + b2[0] for i in range(B2)])
    assert out2.shape == ref2.shape
    assert jnp.allclose(out2, ref2, atol=1e-5, rtol=1e-5)

    print("KERNEL_OK")
</pallas_src>

<mosaic_0001>
module attributes {stable_mosaic.version = 11 : i64} {
  func.func @_corr2d_kernel(%arg0: i32, %arg1: memref<1x16x128xf32, #tpu.memory_space<vmem>>, %arg2: memref<9xf32, #tpu.memory_space<smem>>, %arg3: memref<1xf32, #tpu.memory_space<smem>>, %arg4: memref<1x14x128xf32, #tpu.memory_space<vmem>>) attributes {dimension_semantics = [#tpu.dimension_semantics<parallel>], iteration_bounds = array<i64: 1>, scalar_prefetch = 0 : i64, scratch_operands = 0 : i64, tpu.core_type = #tpu.core_type<tc>, window_params = [{transform_indices = @transform_0, window_bounds = array<i64: 1, 16, 128>}, {transform_indices = @transform_1, window_bounds = array<i64: 9>}, {transform_indices = @transform_2, window_bounds = array<i64: 1>}, {transform_indices = @transform_3, window_bounds = array<i64: 1, 14, 128>}]} {
    %c0 = arith.constant 0 : index
    %0 = memref.load %arg3[%c0] : memref<1xf32, #tpu.memory_space<smem>>
    %c0_i32 = arith.constant 0 : i32
    %c1_i32 = arith.constant 1 : i32
    %1 = arith.muli %c0_i32, %c1_i32 : i32
    %c0_i32_0 = arith.constant 0 : i32
    %2 = arith.addi %c0_i32_0, %1 : i32
    %3 = arith.index_cast %2 : i32 to index
    %c0_1 = arith.constant 0 : index
    %c0_2 = arith.constant 0 : index
    %4 = vector.load %arg1[%3, %c0_1, %c0_2] : memref<1x16x128xf32, #tpu.memory_space<vmem>>, vector<1x16x128xf32>
    %5 = vector.shape_cast %4 : vector<1x16x128xf32> to vector<16x128xf32>
    %c127_i32 = arith.constant 127 : i32
    %6 = tpu.dynamic_rotate %5 by %c127_i32 dim 1 : vector<16x128xf32>, i32 -> vector<16x128xf32>
    %c126_i32 = arith.constant 126 : i32
    %7 = tpu.dynamic_rotate %5 by %c126_i32 dim 1 : vector<16x128xf32>, i32 -> vector<16x128xf32>
    %8 = vector.broadcast %0 : f32 to vector<14x128xf32>
    %9 = vector.extract_strided_slice %5 {offsets = [0, 0], sizes = [14, 128], strides = [1, 1]} : vector<16x128xf32> to vector<14x128xf32>
    %c0_3 = arith.constant 0 : index
    %10 = memref.load %arg2[%c0_3] : memref<9xf32, #tpu.memory_space<smem>>
    %11 = vector.broadcast %10 : f32 to vector<14x128xf32>
    %12 = arith.mulf %9, %11 : vector<14x128xf32>
    %13 = arith.addf %8, %12 : vector<14x128xf32>
    %14 = vector.extract_strided_slice %6 {offsets = [0, 0], sizes = [14, 128], strides = [1, 1]} : vector<16x128xf32> to vector<14x128xf32>
    %c1 = arith.constant 1 : index
    %15 = memref.load %arg2[%c1] : memref<9xf32, #tpu.memory_space<smem>>
    %16 = vector.broadcast %15 : f32 to vector<14x128xf32>
    %17 = arith.mulf %14, %16 : vector<14x128xf32>
    %18 = arith.addf %13, %17 : vector<14x128xf32>
    %19 = vector.extract_strided_slice %7 {offsets = [0, 0], sizes = [14, 128], strides = [1, 1]} : vector<16x128xf32> to vector<14x128xf32>
    %c2 = arith.constant 2 : index
    %20 = memref.load %arg2[%c2] : memref<9xf32, #tpu.memory_space<smem>>
    %21 = vector.broadcast %20 : f32 to vector<14x128xf32>
    %22 = arith.mulf %19, %21 : vector<14x128xf32>
    %23 = arith.addf %18, %22 : vector<14x128xf32>
    %24 = vector.extract_strided_slice %5 {offsets = [1, 0], sizes = [14, 128], strides = [1, 1]} : vector<16x128xf32> to vector<14x128xf32>
    %c3 = arith.constant 3 : index
    %25 = memref.load %arg2[%c3] : memref<9xf32, #tpu.memory_space<smem>>
    %26 = vector.broadcast %25 : f32 to vector<14x128xf32>
    %27 = arith.mulf %24, %26 : vector<14x128xf32>
    %28 = arith.addf %23, %27 : vector<14x128xf32>
    %29 = vector.extract_strided_slice %6 {offsets = [1, 0], sizes = [14, 128], strides = [1, 1]} : vector<16x128xf32> to vector<14x128xf32>
    %c4 = arith.constant 4 : index
    %30 = memref.load %arg2[%c4] : memref<9xf32, #tpu.memory_space<smem>>
    %31 = vector.broadcast %30 : f32 to vector<14x128xf32>
    %32 = arith.mulf %29, %31 : vector<14x128xf32>
    %33 = arith.addf %28, %32 : vector<14x128xf32>
    %34 = vector.extract_strided_slice %7 {offsets = [1, 0], sizes = [14, 128], strides = [1, 1]} : vector<16x128xf32> to vector<14x128xf32>
    %c5 = arith.constant 5 : index
    %35 = memref.load %arg2[%c5] : memref<9xf32, #tpu.memory_space<smem>>
    %36 = vector.broadcast %35 : f32 to vector<14x128xf32>
    %37 = arith.mulf %34, %36 : vector<14x128xf32>
    %38 = arith.addf %33, %37 : vector<14x128xf32>
    %39 = vector.extract_strided_slice %5 {offsets = [2, 0], sizes = [14, 128], strides = [1, 1]} : vector<16x128xf32> to vector<14x128xf32>
    %c6 = arith.constant 6 : index
    %40 = memref.load %arg2[%c6] : memref<9xf32, #tpu.memory_space<smem>>
    %41 = vector.broadcast %40 : f32 to vector<14x128xf32>
    %42 = arith.mulf %39, %41 : vector<14x128xf32>
    %43 = arith.addf %38, %42 : vector<14x128xf32>
    %44 = vector.extract_strided_slice %6 {offsets = [2, 0], sizes = [14, 128], strides = [1, 1]} : vector<16x128xf32> to vector<14x128xf32>
    %c7 = arith.constant 7 : index
    %45 = memref.load %arg2[%c7] : memref<9xf32, #tpu.memory_space<smem>>
    %46 = vector.broadcast %45 : f32 to vector<14x128xf32>
    %47 = arith.mulf %44, %46 : vector<14x128xf32>
    %48 = arith.addf %43, %47 : vector<14x128xf32>
    %49 = vector.extract_strided_slice %7 {offsets = [2, 0], sizes = [14, 128], strides = [1, 1]} : vector<16x128xf32> to vector<14x128xf32>
    %c8 = arith.constant 8 : index
    %50 = memref.load %arg2[%c8] : memref<9xf32, #tpu.memory_space<smem>>
    %51 = vector.broadcast %50 : f32 to vector<14x128xf32>
    %52 = arith.mulf %49, %51 : vector<14x128xf32>
    %53 = arith.addf %48, %52 : vector<14x128xf32>
    %54 = arith.index_cast %2 : i32 to index
    %c0_4 = arith.constant 0 : index
    %c0_5 = arith.constant 0 : index
    %55 = vector.load %arg4[%54, %c0_4, %c0_5] : memref<1x14x128xf32, #tpu.memory_space<vmem>>, vector<1x14x128xf32>
    %56 = vector.shape_cast %55 : vector<1x14x128xf32> to vector<14x128xf32>
    %57 = vector.shape_cast %53 : vector<14x128xf32> to vector<1x14x128xf32>
    tpu.vector_store %arg4[%54, %c0_4, %c0_5], %57 {strides = array<i32>} : memref<1x14x128xf32, #tpu.memory_space<vmem>>, vector<1x14x128xf32>,
    %c1_i32_6 = arith.constant 1 : i32
    return
  }
  func.func @transform_0(%arg0: i32) -> (i32, i32, i32) {
    %c0_i32 = arith.constant 0 : i32
    %c0_i32_0 = arith.constant 0 : i32
    %c0_i32_1 = arith.constant 0 : i32
    return %arg0, %c0_i32, %c0_i32_0 : i32, i32, i32
  }
  func.func @transform_1(%arg0: i32) -> i32 {
    %c0_i32 = arith.constant 0 : i32
    %c0_i32_0 = arith.constant 0 : i32
    return %c0_i32 : i32
  }
  func.func @transform_2(%arg0: i32) -> i32 {
    %c0_i32 = arith.constant 0 : i32
    %c0_i32_0 = arith.constant 0 : i32
    return %c0_i32 : i32
  }
  func.func @transform_3(%arg0: i32) -> (i32, i32, i32) {
    %c0_i32 = arith.constant 0 : i32
    %c0_i32_0 = arith.constant 0 : i32
    %c0_i32_1 = arith.constant 0 : i32
    return %arg0, %c0_i32, %c0_i32_0 : i32, i32, i32
  }
}

</mosaic_0001>

<llo_original>
// kernel: tpu_custom_call.1
$region0: #{tpu_custom_call.1}
  #allocation0 [shape = 'u32[]', space=smem, size = 0x4, offset = 0x4, fixed_abs, tag = 'smem constant byte address 0x4 - core index']
  #allocation1 [shape = 'u32[144,128]{1,0:T(1,128)}', space=vmem, size = 0x12000, scoped, tag = 'internal scratch']
  #allocation2 [shape = 'f32[1]{0:T(128)S(6)}', space=smem, size = 0x200, scoped, tag = 'scoped memory for tpu_custom_call.1']
  %s0 = inlined_call_operand.hbm [shape: f32[1,16,128], index: 0, kind: input, shape index: {}]
  %s1 = inlined_call_operand.vmem [shape: f32[9], index: 1, kind: input, shape index: {}]
  %s2 = inlined_call_operand.<no memory space> [shape: f32[1], index: 2, kind: input, shape index: {}]
  %s3 = inlined_call_operand.vmem [shape: f32[1,14,128], index: 3, kind: output, shape index: {}]
  %s4 = sld [smem:[#allocation0]]
  $region30: #{tpu_custom_call.1} parent=0
    _
  %s6 = ssub.s32 1, %s4
  %s7 = scalar_select 0, %s6, %s4
  %8 = sst [smem:[#allocation2]] %s2
  $region1: #{tpu_custom_call.1} parent=0
    #allocation3 [shape = 'u8[8192]{0}', space=vmem, size = 0x2000, scoped, tag = 'input window, operand 0, single buffered']
    #allocation4 [shape = 's32[1]{0}', space=sflag, size = 0x4, scoped, tag = 'scoped memory for tpu_custom_call.1']
    #allocation5 [shape = 's32[1]{0}', space=sflag, size = 0x4, scoped, tag = 'scoped memory for tpu_custom_call.1']
    #allocation6 [shape = 'u8[512]{0}', space=smem, size = 0x200, scoped, tag = 'input window, operand 1, single buffered']
    %9 = vsyncpa [#allocation4], 0
    %10 = vsyncpa [#allocation5], 0
    // Predicated region
    $region2: #{tpu_custom_call.1} parent=1 // pred_check
      _
    $region3: #{tpu_custom_call.1} parent=1 // pred_check_branch
      %12 = sbr.rel (0) target = $region5
    $region4: #{tpu_custom_call.1} parent=1 // pred_region
      %s14 = ssub.s32 256, 256
      %15 = vsyncadd [#allocation4], %s14
      %s16 = sshll.u32 [#allocation3], 4
      %s17 = int_to_ptr.vmem [resolvable:$true] %s16
      %22 = dma.hbm_to_vmem [thread:$0]  %s0, 256, %s17, [#allocation4], 128, 128, 8
    $region5: #{tpu_custom_call.1} parent=1 // pred_fallthru
      _
    // Predicated region
    $region6: #{tpu_custom_call.1} parent=1 // pred_check
      _
    $region7: #{tpu_custom_call.1} parent=1 // pred_check_branch
      %24 = sbr.rel (0) target = $region9
    $region8: #{tpu_custom_call.1} parent=1 // pred_region
      %s26 = ssub.s32 16, 16
      %27 = vsyncadd [#allocation5], %s26
      %s29 = sshll.u32 %s1, 4
      %s30 = int_to_ptr.vmem [resolvable:$true] %s29
      %32 = dma.vmem_to_smem %s30, 16, [#allocation6], [#allocation5]
    $region9: #{tpu_custom_call.1} parent=1 // pred_fallthru
      _
    // Predicated region
    $region10: #{tpu_custom_call.1} parent=1 // pred_check
      _
    $region11: #{tpu_custom_call.1} parent=1 // pred_check_branch
      %34 = sbr.rel (0) target = $region13
    $region12: #{tpu_custom_call.1} parent=1 // pred_region
      _
    $region13: #{tpu_custom_call.1} parent=1 // pred_fallthru
      _
    // Predicated region
    $region14: #{tpu_custom_call.1} parent=1 // pred_check
      _
    $region15: #{tpu_custom_call.1} parent=1 // pred_check_branch
      %36 = sbr.rel (0) target = $region17
    $region16: #{tpu_custom_call.1} parent=1 // pred_region
      %37 = dma.done [#allocation4], 256
    $region17: #{tpu_custom_call.1} parent=1 // pred_fallthru
      _
    // Predicated region
    $region18: #{tpu_custom_call.1} parent=1 // pred_check
      _
    $region19: #{tpu_custom_call.1} parent=1 // pred_check_branch
      %39 = sbr.rel (0) target = $region21
    $region20: #{tpu_custom_call.1} parent=1 // pred_region
      %40 = dma.done [#allocation5], 16
    $region21: #{tpu_custom_call.1} parent=1 // pred_fallthru
      _
    %41 = sfence
    %s42 = sld [smem:[#allocation2]]
    %v43 = vld [vmem:[#allocation3] sm:$0xff]
    %v44 = vld [vmem:[#allocation3 + $0x8] sm:$0xff]
    %45 = vrot.lane.b32.xlu0 %v43, 127
    %v46 = vpop.permute.xlu0 %45
    %47 = vrot.lane.b32.xlu0 %v44, 127
    %v48 = vpop.permute.xlu0 %47
    %49 = vrot.lane.b32.xlu0 %v43, 126
    %v50 = vpop.permute.xlu0 %49
    %51 = vrot.lane.b32.xlu0 %v44, 126
    %v52 = vpop.permute.xlu0 %51
    %v53 = vstv %s42
    %s54 = sld [smem:[#allocation6]]
    %v55 = vstv %s54
    %v56 = vmul.f32 %v43, %v55
    %v57 = vmul.f32 %v44, %v55
    %v58 = vadd.f32 %v53, %v56
    %v59 = vadd.f32 %v53, %v57
    %s60 = sld [smem:[#allocation6 + $0x1]]
    %v61 = vstv %s60
    %v62 = vmul.f32 %v46, %v61
    %v63 = vmul.f32 %v48, %v61
    %v64 = vadd.f32 %v58, %v62
    %v65 = vadd.f32 %v59, %v63
    %s66 = sld [smem:[#allocation6 + $0x2]]
    %v67 = vstv %s66
    %v68 = vmul.f32 %v50, %v67
    %v69 = vmul.f32 %v52, %v67
    %v70 = vadd.f32 %v64, %v68
    %v71 = vadd.f32 %v65, %v69
    %s72 = sld [smem:[#allocation6 + $0x3]]
    %v73 = vstv %s72
    %v74 = vmul.f32 %v43, %v73
    %v75 = vmul.f32 %v44, %v73
    %vm78 = vcmask 1046528
    %v79 = vrot.slane %v74, 1
    %v80 = vrot.slane %v75, 1
    %v81 = vsel %vm78, %v79, %v80
    %v84 = vadd.f32 %v70, %v81
    %v85 = vadd.f32 %v71, %v80
    %s86 = sld [smem:[#allocation6 + $0x4]]
    %v87 = vstv %s86
    %v88 = vmul.f32 %v46, %v87
    %v89 = vmul.f32 %v48, %v87
    %v92 = vrot.slane %v88, 1
    %v93 = vrot.slane %v89, 1
    %v94 = vsel %vm78, %v92, %v93
    %v97 = vadd.f32 %v84, %v94
    %v98 = vadd.f32 %v85, %v93
    %s99 = sld [smem:[#allocation6 + $0x5]]
    %v100 = vstv %s99
    %v101 = vmul.f32 %v50, %v100
    %v102 = vmul.f32 %v52, %v100
    %v105 = vrot.slane %v101, 1
    %v106 = vrot.slane %v102, 1
    %v107 = vsel %vm78, %v105, %v106
    %v110 = vadd.f32 %v97, %v107
    %v111 = vadd.f32 %v98, %v106
    %s112 = sld [smem:[#allocation6 + $0x6]]
    %v113 = vstv %s112
    %v114 = vmul.f32 %v43, %v113
    %v115 = vmul.f32 %v44, %v113
    %vm118 = vcmask 1045504
    %v119 = vrot.slane %v114, 2
    %v120 = vrot.slane %v115, 2
    %v121 = vsel %vm118, %v119, %v120
    %v124 = vadd.f32 %v110, %v121
    %v125 = vadd.f32 %v111, %v120
    %s126 = sld [smem:[#allocation6 + $0x7]]
    %v127 = vstv %s126
    %v128 = vmul.f32 %v46, %v127
    %v129 = vmul.f32 %v48, %v127
    %v132 = vrot.slane %v128, 2
    %v133 = vrot.slane %v129, 2
    %v134 = vsel %vm118, %v132, %v133
    %v137 = vadd.f32 %v124, %v134
    %v138 = vadd.f32 %v125, %v133
    %s139 = sld [smem:[#allocation6 + $0x8]]
    %v140 = vstv %s139
    %v141 = vmul.f32 %v50, %v140
    %v142 = vmul.f32 %v52, %v140
    %v145 = vrot.slane %v141, 2
    %v146 = vrot.slane %v142, 2
    %v147 = vsel %vm118, %v145, %v146
    %v150 = vadd.f32 %v137, %v147
    %v151 = vadd.f32 %v138, %v146
    %152 = vst [vmem:[%s3] sm:$0xff] %v150
    %153 = vst [vmem:[%s3 + $0x8] sm:$0x3f] %v151
    // Predicated region
    $region22: #{tpu_custom_call.1} parent=1 // pred_check
      _
    $region23: #{tpu_custom_call.1} parent=1 // pred_check_branch
      %155 = sbr.rel (0) target = $region25
    $region24: #{tpu_custom_call.1} parent=1 // pred_region
      _
    $region25: #{tpu_custom_call.1} parent=1 // pred_fallthru
      _
    // Predicated region
    $region26: #{tpu_custom_call.1} parent=1 // pred_check
      _
    $region27: #{tpu_custom_call.1} parent=1 // pred_check_branch
      %157 = sbr.rel (0) target = $region29
    $region28: #{tpu_custom_call.1} parent=1 // pred_region
      _
    $region29: #{tpu_custom_call.1} parent=1 // pred_fallthru
      _
    %158 = vsyncpa [#allocation4], 1
    %159 = vsyncpa [#allocation5], 1

</llo_original>
